<compile_context>
chip_gen: v7x
topology: tpu7x:2x2x1
jax: 0.10.0
libtpu: 0.0.40
codegen_flags: <defaults>
</compile_context>

<pallas_src>
import functools

import jax
import jax.numpy as jnp
from jax.experimental import pallas as pl
from jax.experimental.pallas import tpu as pltpu

KS = 3          # conv kernel size
STRIDE = 2      # conv stride
O_PAD = 128     # lane-dense padded output width
MAX_B_TILE = 256  # max batch rows per grid step (amortizes h@Whh MXU latency)


def _round_up(x, m):
    return (x + m - 1) // m * m


# ---------------------------------------------------------------------------
# Fused kernel for one batch tile:
#   CNN head -> hoisted x-projection -> unrolled LSTM recurrence -> FC
# ---------------------------------------------------------------------------
def _fused_kernel(x_ref, wconv_ref, bconv_ref, w1_ref, b1_ref,
                  wih_ref, b4_ref, whh_ref, wfc_ref, bfc_ref,
                  out_ref, *, n_seq, global_pool):
    # x:     (T*B_tile, input_size) bf16, time-major rows (row = t*B_tile + b)
    # wconv: (input_size, C*L) bf16 dense strided-conv weight (channel-major cols)
    # bconv: (1, C*L) f32
    # w1:    (C*L, F) bf16 ; b1 (1, F) f32           Flatten -> Linear
    # wih:   (F, 4H) bf16 ; b4 (1, 4H) f32           fused gates, cols [i|f|o|g]
    # whh:   (H, 4H) bf16                            fused recurrent proj [i|f|o|g]
    # wfc:   (H, O_PAD) bf16 ; bfc (1, O_PAD) f32    final Linear (lane-dense padded)
    # out:   (B_tile, O_PAD) f32
    b_tile = out_ref.shape[0]
    hidden = whh_ref.shape[0]

    x = x_ref[...]                                                     # (N, in) bf16

    # ---- time-distributed CNN head: Conv1d -> ReLU -> Flatten -> Linear ----
    conv = jnp.dot(x, wconv_ref[...], preferred_element_type=jnp.float32)
    conv = jnp.maximum(conv + bconv_ref[...], 0.0)                     # (N, C*L) f32
    feat = jnp.dot(conv.astype(w1_ref.dtype), w1_ref[...],
                   preferred_element_type=jnp.float32) + b1_ref[...]   # (N, F) f32

    # ---- hoisted LSTM input projection for all timesteps (one matmul) ----
    xproj = jnp.dot(feat.astype(wih_ref.dtype), wih_ref[...],
                    preferred_element_type=jnp.float32) + b4_ref[...]  # (N, 4H) f32

    # ---- LSTM recurrence, fully unrolled (T static), 1 matmul per step ----
    # TODO(synk): for large n_seq switch to a chunked lax.fori_loop(unroll=k)
    # so the unrolled live ranges do not blow past 64 vregs.
    whh = whh_ref[...]
    h = jnp.zeros((b_tile, hidden), jnp.float32)
    c = jnp.zeros((b_tile, hidden), jnp.float32)
    if global_pool:
        hmax = jnp.full((b_tile, hidden), -jnp.inf, jnp.float32)
    for t in range(n_seq):
        # sublane-aligned contiguous static slice (b_tile is a multiple of 8)
        x_t = xproj[t * b_tile:(t + 1) * b_tile, :]                    # (B, 4H)
        gates = x_t + jnp.dot(h.astype(whh.dtype), whh,
                              preferred_element_type=jnp.float32)      # (B, 4H) f32
        sig = jax.nn.sigmoid(gates[:, :3 * hidden])                    # [i|f|o], 1 EUP pass
        g_g = jnp.tanh(gates[:, 3 * hidden:])                          # [g],     1 EUP pass
        i_g = sig[:, 0 * hidden:1 * hidden]
        f_g = sig[:, 1 * hidden:2 * hidden]
        o_g = sig[:, 2 * hidden:3 * hidden]
        c = f_g * c + i_g * g_g
        h = o_g * jnp.tanh(c)
        if global_pool:
            hmax = jnp.maximum(hmax, h)

    pooled = hmax if global_pool else h
    out_ref[...] = jnp.dot(pooled.astype(wfc_ref.dtype), wfc_ref[...],
                           preferred_element_type=jnp.float32) + bfc_ref[...]


# ---------------------------------------------------------------------------
# Parameter construction (deterministic, PyTorch-shaped)
# ---------------------------------------------------------------------------
def init_params(key, input_size, out_size=5):
    hidden_ch = input_size // 2
    n_features = input_size // 2
    hidden_lstm = input_size // 2
    conv_len = (input_size - KS) // STRIDE + 1
    keys = jax.random.split(key, 10)

    def uinit(k, shape, fan_in):
        bound = 1.0 / float(fan_in) ** 0.5
        return jax.random.uniform(k, shape, jnp.float32, -bound, bound)

    return {
        "Wc": uinit(keys[0], (hidden_ch, KS), KS),              # Conv1d weight (in_ch=1 squeezed)
        "bc": uinit(keys[1], (hidden_ch,), KS),
        "W1": uinit(keys[2], (n_features, hidden_ch * conv_len), hidden_ch * conv_len),
        "b1": uinit(keys[3], (n_features,), hidden_ch * conv_len),
        "Wih": uinit(keys[4], (4 * hidden_lstm, n_features), hidden_lstm),
        "Whh": uinit(keys[5], (4 * hidden_lstm, hidden_lstm), hidden_lstm),
        "bih": uinit(keys[6], (4 * hidden_lstm,), hidden_lstm),
        "bhh": uinit(keys[7], (4 * hidden_lstm,), hidden_lstm),
        "Wfc": uinit(keys[8], (out_size, hidden_lstm), hidden_lstm),
        "bfc": uinit(keys[9], (out_size,), hidden_lstm),
    }


# ---------------------------------------------------------------------------
# One-time kernel-layout weight packing (dense conv matrix, gate permutation,
# transposes, lane-dense FC padding, bf16 casts).  Build once, reuse per call.
# ---------------------------------------------------------------------------
def pack_params(params, input_size, out_size=5):
    C = input_size // 2
    L = (input_size - KS) // STRIDE + 1
    H = input_size // 2

    # Dense strided-Conv1d weight with channel-major flatten columns:
    #   Wdense[l*STRIDE + k, c*L + l] = Wc[c, k]
    # TODO(synk): for input_size beyond the MXU contraction tile (128/256),
    # switch to an im2col (N*L, KS)@(KS, C) layout instead of this zero-padded
    # matrix (zero padding burns extra MXU passes + HBM weight bytes there).
    taps = jnp.arange(L)[:, None] * STRIDE + jnp.arange(KS)[None, :]                 # (L, K)
    sel = (jnp.arange(input_size)[:, None, None] == taps[None]).astype(jnp.float32)  # (in, L, K)
    wconv = jnp.einsum("ilk,ck->icl", sel, params["Wc"]).reshape(input_size, C * L)
    bconv = jnp.repeat(params["bc"], L)[None, :]                                     # (1, C*L)

    # Reorder PyTorch's fused-gate columns [i|f|g|o] -> [i|f|o|g] so the kernel
    # applies one sigmoid to [:, :3H] and one tanh to [:, 3H:].
    perm = jnp.concatenate([jnp.arange(0, 2 * H),
                            jnp.arange(3 * H, 4 * H),
                            jnp.arange(2 * H, 3 * H)])
    wih = params["Wih"].T[:, perm]                                                   # (F, 4H)
    whh = params["Whh"].T[:, perm]                                                   # (H, 4H)
    b4 = (params["bih"] + params["bhh"])[perm][None, :]                              # (1, 4H)

    # Lane-dense (128-wide) padded FC weight/bias -> unmasked vector stores.
    wfc = jnp.zeros((H, O_PAD), jnp.float32).at[:, :out_size].set(params["Wfc"].T)
    bfc = jnp.zeros((1, O_PAD), jnp.float32).at[:, :out_size].set(params["bfc"][None, :])

    bf16 = jnp.bfloat16
    return {
        "wconv": wconv.astype(bf16), "bconv": bconv,
        "w1": params["W1"].T.astype(bf16), "b1": params["b1"][None, :],
        "wih": wih.astype(bf16), "b4": b4,
        "whh": whh.astype(bf16),
        "wfc": wfc.astype(bf16), "bfc": bfc,
    }


# ---------------------------------------------------------------------------
# Forward pass wrapper: batch-grid pallas_call + layout plumbing
# ---------------------------------------------------------------------------
@functools.partial(jax.jit, static_argnames=("out_size", "global_pool"))
def cnn_lstm_forward(x, packed, out_size=5, global_pool=False):
    bs, n_seq, input_size = x.shape

    # Batch tile: multiple of 8 sublanes, capped so the per-step x DMA is
    # pipelined behind the CNN-head matmuls and VMEM stays bounded (v7x 64MiB).
    b_tile = min(MAX_B_TILE, _round_up(bs, 8))
    b_pad = _round_up(bs, b_tile)
    n_blocks = b_pad // b_tile

    # Per-block time-major layout: x_blk[i, t*b_tile + b, :] = x[i*b_tile+b, t, :]
    # so each timestep's batch slab inside the kernel is sublane-aligned and
    # contiguous.  bf16 cast halves the x DMA bytes.
    x_pad = x if b_pad == bs else jnp.pad(x, ((0, b_pad - bs), (0, 0), (0, 0)))
    x_blk = (x_pad.reshape(n_blocks, b_tile, n_seq, input_size)
                  .transpose(0, 2, 1, 3)
                  .reshape(n_blocks, n_seq * b_tile, input_size)
                  .astype(jnp.bfloat16))

    def full(arr):  # whole-array weight block, constant index -> loaded once
        return pl.BlockSpec(arr.shape, lambda i, _nd=arr.ndim: (0,) * _nd)

    kernel = functools.partial(_fused_kernel, n_seq=n_seq, global_pool=global_pool)
    out = pl.pallas_call(
        kernel,
        out_shape=jax.ShapeDtypeStruct((b_pad, O_PAD), jnp.float32),
        grid=(n_blocks,),
        in_specs=[
            pl.BlockSpec((None, n_seq * b_tile, input_size), lambda i: (i, 0, 0)),
            full(packed["wconv"]), full(packed["bconv"]),
            full(packed["w1"]), full(packed["b1"]),
            full(packed["wih"]), full(packed["b4"]),
            full(packed["whh"]),
            full(packed["wfc"]), full(packed["bfc"]),
        ],
        out_specs=pl.BlockSpec((b_tile, O_PAD), lambda i: (i, 0)),
        compiler_params=pltpu.CompilerParams(
            dimension_semantics=("parallel",),           # 2 TCs on v7x split batch
            vmem_limit_bytes=32 * 1024 * 1024),
    )(x_blk, packed["wconv"], packed["bconv"], packed["w1"], packed["b1"],
      packed["wih"], packed["b4"], packed["whh"], packed["wfc"], packed["bfc"])
    return out[:bs, :out_size]


# ---------------------------------------------------------------------------
# Pure-JAX reference (mirrors the PyTorch forward exactly, f32 throughout)
# ---------------------------------------------------------------------------
def reference_forward(x, params, out_size=5, global_pool=False):
    bs, n_seq, input_size = x.shape
    C = input_size // 2
    F = input_size // 2
    H = input_size // 2
    L = (input_size - KS) // STRIDE + 1
    N = bs * n_seq

    x2 = x.reshape(N, input_size)
    idx = jnp.arange(L)[:, None] * STRIDE + jnp.arange(KS)[None, :]
    patches = x2[:, idx]                                                 # (N, L, K)
    conv = jnp.einsum("nlk,ck->ncl", patches, params["Wc"]) + params["bc"][None, :, None]
    conv = jnp.maximum(conv, 0.0)                                        # (N, C, L)
    flat = conv.reshape(N, C * L)                                        # channel-major flatten
    feat = flat @ params["W1"].T + params["b1"]                          # (N, F)
    feat = feat.reshape(bs, n_seq, F)

    h = jnp.zeros((bs, H), jnp.float32)
    c = jnp.zeros((bs, H), jnp.float32)
    hs = []
    for t in range(n_seq):
        xt = feat[:, t, :]
        gates = xt @ params["Wih"].T + h @ params["Whh"].T + params["bih"] + params["bhh"]
        i = jax.nn.sigmoid(gates[:, :H])
        f = jax.nn.sigmoid(gates[:, H:2 * H])
        g = jnp.tanh(gates[:, 2 * H:3 * H])
        o = jax.nn.sigmoid(gates[:, 3 * H:])
        c = f * c + i * g
        h = o * jnp.tanh(c)
        hs.append(h)
    pooled = jnp.max(jnp.stack(hs, axis=1), axis=1) if global_pool else hs[-1]
    return pooled @ params["Wfc"].T + params["bfc"]


if __name__ == "__main__":
    key = jax.random.PRNGKey(0)
    kx, kp = jax.random.split(key)
    bs, n_seq, input_size, out_size = 2, 8, 16, 5

    x = jax.random.normal(kx, (bs, n_seq, input_size), jnp.float32)
    params = init_params(kp, input_size, out_size)
    packed = pack_params(params, input_size, out_size)

    # default path (last timestep)
    out = cnn_lstm_forward(x, packed, out_size=out_size, global_pool=False)
    out = jax.block_until_ready(out)
    ref = reference_forward(x, params, out_size=out_size, global_pool=False)
    assert out.shape == (bs, out_size)
    # bf16 MXU operands vs f32 reference -> relaxed tolerance
    assert jnp.allclose(out, ref, atol=3e-2, rtol=3e-2), (out, ref)

    # global_pool path (max over time)
    out_gp = cnn_lstm_forward(x, packed, out_size=out_size, global_pool=True)
    out_gp = jax.block_until_ready(out_gp)
    ref_gp = reference_forward(x, params, out_size=out_size, global_pool=True)
    assert jnp.allclose(out_gp, ref_gp, atol=3e-2, rtol=3e-2), (out_gp, ref_gp)

    print("KERNEL_OK")
</pallas_src>

<mosaic_0001>
module attributes {stable_mosaic.version = 11 : i64} {
  func.func @_fused_kernel(%arg0: i32, %arg1: memref<1x64x16xbf16, #tpu.memory_space<vmem>>, %arg2: memref<16x56xbf16, #tpu.memory_space<vmem>>, %arg3: memref<1x56xf32, #tpu.memory_space<vmem>>, %arg4: memref<56x8xbf16, #tpu.memory_space<vmem>>, %arg5: memref<1x8xf32, #tpu.memory_space<vmem>>, %arg6: memref<8x32xbf16, #tpu.memory_space<vmem>>, %arg7: memref<1x32xf32, #tpu.memory_space<vmem>>, %arg8: memref<8x32xbf16, #tpu.memory_space<vmem>>, %arg9: memref<8x128xbf16, #tpu.memory_space<vmem>>, %arg10: memref<1x128xf32, #tpu.memory_space<vmem>>, %arg11: memref<8x128xf32, #tpu.memory_space<vmem>>) attributes {dimension_semantics = [#tpu.dimension_semantics<parallel>], iteration_bounds = array<i64: 1>, scalar_prefetch = 0 : i64, scratch_operands = 0 : i64, tpu.core_type = #tpu.core_type<tc>, window_params = [{transform_indices = @transform_0, window_bounds = array<i64: 1, 64, 16>}, {pipeline_mode = #tpu.pipeline_mode<synchronous>, transform_indices = @transform_1, window_bounds = array<i64: 16, 56>}, {pipeline_mode = #tpu.pipeline_mode<synchronous>, transform_indices = @transform_2, window_bounds = array<i64: 1, 56>}, {pipeline_mode = #tpu.pipeline_mode<synchronous>, transform_indices = @transform_3, window_bounds = array<i64: 56, 8>}, {pipeline_mode = #tpu.pipeline_mode<synchronous>, transform_indices = @transform_4, window_bounds = array<i64: 1, 8>}, {pipeline_mode = #tpu.pipeline_mode<synchronous>, transform_indices = @transform_5, window_bounds = array<i64: 8, 32>}, {pipeline_mode = #tpu.pipeline_mode<synchronous>, transform_indices = @transform_6, window_bounds = array<i64: 1, 32>}, {pipeline_mode = #tpu.pipeline_mode<synchronous>, transform_indices = @transform_7, window_bounds = array<i64: 8, 32>}, {pipeline_mode = #tpu.pipeline_mode<synchronous>, transform_indices = @transform_8, window_bounds = array<i64: 8, 128>}, {pipeline_mode = #tpu.pipeline_mode<synchronous>, transform_indices = @transform_9, window_bounds = array<i64: 1, 128>}, {transform_indices = @transform_10, window_bounds = array<i64: 8, 128>}]} {
    %c0 = arith.constant 0 : index
    %c0_0 = arith.constant 0 : index
    %c0_1 = arith.constant 0 : index
    %0 = vector.load %arg1[%c0, %c0_0, %c0_1] : memref<1x64x16xbf16, #tpu.memory_space<vmem>>, vector<1x64x16xbf16>
    %1 = vector.shape_cast %0 : vector<1x64x16xbf16> to vector<64x16xbf16>
    %c0_2 = arith.constant 0 : index
    %c0_3 = arith.constant 0 : index
    %2 = vector.load %arg2[%c0_2, %c0_3] : memref<16x56xbf16, #tpu.memory_space<vmem>>, vector<16x56xbf16>
    %cst = arith.constant dense<0.000000e+00> : vector<64x56xf32>
    %3 = tpu.matmul %1, %2, %cst {dimension_numbers = #tpu.dot_dimension_numbers<[1], [0], [0], [1], [0, 0, 1, 1], [], []>} : vector<64x16xbf16>, vector<16x56xbf16>, vector<64x56xf32> -> vector<64x56xf32>
    %c0_4 = arith.constant 0 : index
    %c0_5 = arith.constant 0 : index
    %4 = vector.load %arg3[%c0_4, %c0_5] : memref<1x56xf32, #tpu.memory_space<vmem>>, vector<1x56xf32>
    %5 = vector.broadcast %4 : vector<1x56xf32> to vector<64x56xf32>
    %6 = arith.addf %3, %5 : vector<64x56xf32>
    %cst_6 = arith.constant 0.000000e+00 : f32
    %7 = vector.broadcast %cst_6 : f32 to vector<64x56xf32>
    %8 = arith.maximumf %6, %7 : vector<64x56xf32>
    %9 = arith.truncf %8 : vector<64x56xf32> to vector<64x56xbf16>
    %c0_7 = arith.constant 0 : index
    %c0_8 = arith.constant 0 : index
    %10 = vector.load %arg4[%c0_7, %c0_8] : memref<56x8xbf16, #tpu.memory_space<vmem>>, vector<56x8xbf16>
    %cst_9 = arith.constant dense<0.000000e+00> : vector<64x8xf32>
    %11 = tpu.matmul %9, %10, %cst_9 {dimension_numbers = #tpu.dot_dimension_numbers<[1], [0], [0], [1], [0, 0, 1, 1], [], []>} : vector<64x56xbf16>, vector<56x8xbf16>, vector<64x8xf32> -> vector<64x8xf32>
    %c0_10 = arith.constant 0 : index
    %c0_11 = arith.constant 0 : index
    %12 = vector.load %arg5[%c0_10, %c0_11] : memref<1x8xf32, #tpu.memory_space<vmem>>, vector<1x8xf32>
    %13 = vector.broadcast %12 : vector<1x8xf32> to vector<64x8xf32>
    %14 = arith.addf %11, %13 : vector<64x8xf32>
    %15 = arith.truncf %14 : vector<64x8xf32> to vector<64x8xbf16>
    %c0_12 = arith.constant 0 : index
    %c0_13 = arith.constant 0 : index
    %16 = vector.load %arg6[%c0_12, %c0_13] : memref<8x32xbf16, #tpu.memory_space<vmem>>, vector<8x32xbf16>
    %cst_14 = arith.constant dense<0.000000e+00> : vector<64x32xf32>
    %17 = tpu.matmul %15, %16, %cst_14 {dimension_numbers = #tpu.dot_dimension_numbers<[1], [0], [0], [1], [0, 0, 1, 1], [], []>} : vector<64x8xbf16>, vector<8x32xbf16>, vector<64x32xf32> -> vector<64x32xf32>
    %c0_15 = arith.constant 0 : index
    %c0_16 = arith.constant 0 : index
    %18 = vector.load %arg7[%c0_15, %c0_16] : memref<1x32xf32, #tpu.memory_space<vmem>>, vector<1x32xf32>
    %19 = vector.broadcast %18 : vector<1x32xf32> to vector<64x32xf32>
    %20 = arith.addf %17, %19 : vector<64x32xf32>
    %c0_17 = arith.constant 0 : index
    %c0_18 = arith.constant 0 : index
    %21 = vector.load %arg8[%c0_17, %c0_18] : memref<8x32xbf16, #tpu.memory_space<vmem>>, vector<8x32xbf16>
    %cst_19 = arith.constant 0.000000e+00 : f32
    %22 = vector.broadcast %cst_19 : f32 to vector<8x8xf32>
    %cst_20 = arith.constant 0.000000e+00 : f32
    %23 = vector.broadcast %cst_20 : f32 to vector<8x8xf32>
    %24 = vector.extract_strided_slice %20 {offsets = [0, 0], sizes = [8, 32], strides = [1, 1]} : vector<64x32xf32> to vector<8x32xf32>
    %25 = arith.truncf %22 : vector<8x8xf32> to vector<8x8xbf16>
    %cst_21 = arith.constant dense<0.000000e+00> : vector<8x32xf32>
    %26 = tpu.matmul %25, %21, %cst_21 {dimension_numbers = #tpu.dot_dimension_numbers<[1], [0], [0], [1], [0, 0, 1, 1], [], []>} : vector<8x8xbf16>, vector<8x32xbf16>, vector<8x32xf32> -> vector<8x32xf32>
    %27 = arith.addf %24, %26 : vector<8x32xf32>
    %28 = vector.extract_strided_slice %27 {offsets = [0, 0], sizes = [8, 24], strides = [1, 1]} : vector<8x32xf32> to vector<8x24xf32>
    %29 = arith.negf %28 : vector<8x24xf32>
    %30 = math.exp %29 : vector<8x24xf32>
    %cst_22 = arith.constant 1.000000e+00 : f32
    %31 = vector.broadcast %cst_22 : f32 to vector<8x24xf32>
    %32 = arith.addf %31, %30 : vector<8x24xf32>
    %33 = arith.divf %31, %32 : vector<8x24xf32>
    %34 = vector.extract_strided_slice %27 {offsets = [0, 24], sizes = [8, 8], strides = [1, 1]} : vector<8x32xf32> to vector<8x8xf32>
    %35 = math.tanh %34 : vector<8x8xf32>
    %36 = vector.extract_strided_slice %33 {offsets = [0, 0], sizes = [8, 8], strides = [1, 1]} : vector<8x24xf32> to vector<8x8xf32>
    %37 = vector.extract_strided_slice %33 {offsets = [0, 8], sizes = [8, 8], strides = [1, 1]} : vector<8x24xf32> to vector<8x8xf32>
    %38 = vector.extract_strided_slice %33 {offsets = [0, 16], sizes = [8, 8], strides = [1, 1]} : vector<8x24xf32> to vector<8x8xf32>
    %39 = arith.mulf %37, %23 : vector<8x8xf32>
    %40 = arith.mulf %36, %35 : vector<8x8xf32>
    %41 = arith.addf %39, %40 : vector<8x8xf32>
    %42 = math.tanh %41 : vector<8x8xf32>
    %43 = arith.mulf %38, %42 : vector<8x8xf32>
    %44 = vector.extract_strided_slice %20 {offsets = [8, 0], sizes = [8, 32], strides = [1, 1]} : vector<64x32xf32> to vector<8x32xf32>
    %45 = arith.truncf %43 : vector<8x8xf32> to vector<8x8xbf16>
    %cst_23 = arith.constant dense<0.000000e+00> : vector<8x32xf32>
    %46 = tpu.matmul %45, %21, %cst_23 {dimension_numbers = #tpu.dot_dimension_numbers<[1], [0], [0], [1], [0, 0, 1, 1], [], []>} : vector<8x8xbf16>, vector<8x32xbf16>, vector<8x32xf32> -> vector<8x32xf32>
    %47 = arith.addf %44, %46 : vector<8x32xf32>
    %48 = vector.extract_strided_slice %47 {offsets = [0, 0], sizes = [8, 24], strides = [1, 1]} : vector<8x32xf32> to vector<8x24xf32>
    %49 = arith.negf %48 : vector<8x24xf32>
    %50 = math.exp %49 : vector<8x24xf32>
    %cst_24 = arith.constant 1.000000e+00 : f32
    %51 = vector.broadcast %cst_24 : f32 to vector<8x24xf32>
    %52 = arith.addf %51, %50 : vector<8x24xf32>
    %53 = arith.divf %51, %52 : vector<8x24xf32>
    %54 = vector.extract_strided_slice %47 {offsets = [0, 24], sizes = [8, 8], strides = [1, 1]} : vector<8x32xf32> to vector<8x8xf32>
    %55 = math.tanh %54 : vector<8x8xf32>
    %56 = vector.extract_strided_slice %53 {offsets = [0, 0], sizes = [8, 8], strides = [1, 1]} : vector<8x24xf32> to vector<8x8xf32>
    %57 = vector.extract_strided_slice %53 {offsets = [0, 8], sizes = [8, 8], strides = [1, 1]} : vector<8x24xf32> to vector<8x8xf32>
    %58 = vector.extract_strided_slice %53 {offsets = [0, 16], sizes = [8, 8], strides = [1, 1]} : vector<8x24xf32> to vector<8x8xf32>
    %59 = arith.mulf %57, %41 : vector<8x8xf32>
    %60 = arith.mulf %56, %55 : vector<8x8xf32>
    %61 = arith.addf %59, %60 : vector<8x8xf32>
    %62 = math.tanh %61 : vector<8x8xf32>
    %63 = arith.mulf %58, %62 : vector<8x8xf32>
    %64 = vector.extract_strided_slice %20 {offsets = [16, 0], sizes = [8, 32], strides = [1, 1]} : vector<64x32xf32> to vector<8x32xf32>
    %65 = arith.truncf %63 : vector<8x8xf32> to vector<8x8xbf16>
    %cst_25 = arith.constant dense<0.000000e+00> : vector<8x32xf32>
    %66 = tpu.matmul %65, %21, %cst_25 {dimension_numbers = #tpu.dot_dimension_numbers<[1], [0], [0], [1], [0, 0, 1, 1], [], []>} : vector<8x8xbf16>, vector<8x32xbf16>, vector<8x32xf32> -> vector<8x32xf32>
    %67 = arith.addf %64, %66 : vector<8x32xf32>
    %68 = vector.extract_strided_slice %67 {offsets = [0, 0], sizes = [8, 24], strides = [1, 1]} : vector<8x32xf32> to vector<8x24xf32>
    %69 = arith.negf %68 : vector<8x24xf32>
    %70 = math.exp %69 : vector<8x24xf32>
    %cst_26 = arith.constant 1.000000e+00 : f32
    %71 = vector.broadcast %cst_26 : f32 to vector<8x24xf32>
    %72 = arith.addf %71, %70 : vector<8x24xf32>
    %73 = arith.divf %71, %72 : vector<8x24xf32>
    %74 = vector.extract_strided_slice %67 {offsets = [0, 24], sizes = [8, 8], strides = [1, 1]} : vector<8x32xf32> to vector<8x8xf32>
    %75 = math.tanh %74 : vector<8x8xf32>
    %76 = vector.extract_strided_slice %73 {offsets = [0, 0], sizes = [8, 8], strides = [1, 1]} : vector<8x24xf32> to vector<8x8xf32>
    %77 = vector.extract_strided_slice %73 {offsets = [0, 8], sizes = [8, 8], strides = [1, 1]} : vector<8x24xf32> to vector<8x8xf32>
    %78 = vector.extract_strided_slice %73 {offsets = [0, 16], sizes = [8, 8], strides = [1, 1]} : vector<8x24xf32> to vector<8x8xf32>
    %79 = arith.mulf %77, %61 : vector<8x8xf32>
    %80 = arith.mulf %76, %75 : vector<8x8xf32>
    %81 = arith.addf %79, %80 : vector<8x8xf32>
    %82 = math.tanh %81 : vector<8x8xf32>
    %83 = arith.mulf %78, %82 : vector<8x8xf32>
    %84 = vector.extract_strided_slice %20 {offsets = [24, 0], sizes = [8, 32], strides = [1, 1]} : vector<64x32xf32> to vector<8x32xf32>
    %85 = arith.truncf %83 : vector<8x8xf32> to vector<8x8xbf16>
    %cst_27 = arith.constant dense<0.000000e+00> : vector<8x32xf32>
    %86 = tpu.matmul %85, %21, %cst_27 {dimension_numbers = #tpu.dot_dimension_numbers<[1], [0], [0], [1], [0, 0, 1, 1], [], []>} : vector<8x8xbf16>, vector<8x32xbf16>, vector<8x32xf32> -> vector<8x32xf32>
    %87 = arith.addf %84, %86 : vector<8x32xf32>
    %88 = vector.extract_strided_slice %87 {offsets = [0, 0], sizes = [8, 24], strides = [1, 1]} : vector<8x32xf32> to vector<8x24xf32>
    %89 = arith.negf %88 : vector<8x24xf32>
    %90 = math.exp %89 : vector<8x24xf32>
    %cst_28 = arith.constant 1.000000e+00 : f32
    %91 = vector.broadcast %cst_28 : f32 to vector<8x24xf32>
    %92 = arith.addf %91, %90 : vector<8x24xf32>
    %93 = arith.divf %91, %92 : vector<8x24xf32>
    %94 = vector.extract_strided_slice %87 {offsets = [0, 24], sizes = [8, 8], strides = [1, 1]} : vector<8x32xf32> to vector<8x8xf32>
    %95 = math.tanh %94 : vector<8x8xf32>
    %96 = vector.extract_strided_slice %93 {offsets = [0, 0], sizes = [8, 8], strides = [1, 1]} : vector<8x24xf32> to vector<8x8xf32>
    %97 = vector.extract_strided_slice %93 {offsets = [0, 8], sizes = [8, 8], strides = [1, 1]} : vector<8x24xf32> to vector<8x8xf32>
    %98 = vector.extract_strided_slice %93 {offsets = [0, 16], sizes = [8, 8], strides = [1, 1]} : vector<8x24xf32> to vector<8x8xf32>
    %99 = arith.mulf %97, %81 : vector<8x8xf32>
    %100 = arith.mulf %96, %95 : vector<8x8xf32>
    %101 = arith.addf %99, %100 : vector<8x8xf32>
    %102 = math.tanh %101 : vector<8x8xf32>
    %103 = arith.mulf %98, %102 : vector<8x8xf32>
    %104 = vector.extract_strided_slice %20 {offsets = [32, 0], sizes = [8, 32], strides = [1, 1]} : vector<64x32xf32> to vector<8x32xf32>
    %105 = arith.truncf %103 : vector<8x8xf32> to vector<8x8xbf16>
    %cst_29 = arith.constant dense<0.000000e+00> : vector<8x32xf32>
    %106 = tpu.matmul %105, %21, %cst_29 {dimension_numbers = #tpu.dot_dimension_numbers<[1], [0], [0], [1], [0, 0, 1, 1], [], []>} : vector<8x8xbf16>, vector<8x32xbf16>, vector<8x32xf32> -> vector<8x32xf32>
    %107 = arith.addf %104, %106 : vector<8x32xf32>
    %108 = vector.extract_strided_slice %107 {offsets = [0, 0], sizes = [8, 24], strides = [1, 1]} : vector<8x32xf32> to vector<8x24xf32>
    %109 = arith.negf %108 : vector<8x24xf32>
    %110 = math.exp %109 : vector<8x24xf32>
    %cst_30 = arith.constant 1.000000e+00 : f32
    %111 = vector.broadcast %cst_30 : f32 to vector<8x24xf32>
    %112 = arith.addf %111, %110 : vector<8x24xf32>
    %113 = arith.divf %111, %112 : vector<8x24xf32>
    %114 = vector.extract_strided_slice %107 {offsets = [0, 24], sizes = [8, 8], strides = [1, 1]} : vector<8x32xf32> to vector<8x8xf32>
    %115 = math.tanh %114 : vector<8x8xf32>
    %116 = vector.extract_strided_slice %113 {offsets = [0, 0], sizes = [8, 8], strides = [1, 1]} : vector<8x24xf32> to vector<8x8xf32>
    %117 = vector.extract_strided_slice %113 {offsets = [0, 8], sizes = [8, 8], strides = [1, 1]} : vector<8x24xf32> to vector<8x8xf32>
    %118 = vector.extract_strided_slice %113 {offsets = [0, 16], sizes = [8, 8], strides = [1, 1]} : vector<8x24xf32> to vector<8x8xf32>
    %119 = arith.mulf %117, %101 : vector<8x8xf32>
    %120 = arith.mulf %116, %115 : vector<8x8xf32>
    %121 = arith.addf %119, %120 : vector<8x8xf32>
    %122 = math.tanh %121 : vector<8x8xf32>
    %123 = arith.mulf %118, %122 : vector<8x8xf32>
    %124 = vector.extract_strided_slice %20 {offsets = [40, 0], sizes = [8, 32], strides = [1, 1]} : vector<64x32xf32> to vector<8x32xf32>
    %125 = arith.truncf %123 : vector<8x8xf32> to vector<8x8xbf16>
    %cst_31 = arith.constant dense<0.000000e+00> : vector<8x32xf32>
    %126 = tpu.matmul %125, %21, %cst_31 {dimension_numbers = #tpu.dot_dimension_numbers<[1], [0], [0], [1], [0, 0, 1, 1], [], []>} : vector<8x8xbf16>, vector<8x32xbf16>, vector<8x32xf32> -> vector<8x32xf32>
    %127 = arith.addf %124, %126 : vector<8x32xf32>
    %128 = vector.extract_strided_slice %127 {offsets = [0, 0], sizes = [8, 24], strides = [1, 1]} : vector<8x32xf32> to vector<8x24xf32>
    %129 = arith.negf %128 : vector<8x24xf32>
    %130 = math.exp %129 : vector<8x24xf32>
    %cst_32 = arith.constant 1.000000e+00 : f32
    %131 = vector.broadcast %cst_32 : f32 to vector<8x24xf32>
    %132 = arith.addf %131, %130 : vector<8x24xf32>
    %133 = arith.divf %131, %132 : vector<8x24xf32>
    %134 = vector.extract_strided_slice %127 {offsets = [0, 24], sizes = [8, 8], strides = [1, 1]} : vector<8x32xf32> to vector<8x8xf32>
    %135 = math.tanh %134 : vector<8x8xf32>
    %136 = vector.extract_strided_slice %133 {offsets = [0, 0], sizes = [8, 8], strides = [1, 1]} : vector<8x24xf32> to vector<8x8xf32>
    %137 = vector.extract_strided_slice %133 {offsets = [0, 8], sizes = [8, 8], strides = [1, 1]} : vector<8x24xf32> to vector<8x8xf32>
    %138 = vector.extract_strided_slice %133 {offsets = [0, 16], sizes = [8, 8], strides = [1, 1]} : vector<8x24xf32> to vector<8x8xf32>
    %139 = arith.mulf %137, %121 : vector<8x8xf32>
    %140 = arith.mulf %136, %135 : vector<8x8xf32>
    %141 = arith.addf %139, %140 : vector<8x8xf32>
    %142 = math.tanh %141 : vector<8x8xf32>
    %143 = arith.mulf %138, %142 : vector<8x8xf32>
    %144 = vector.extract_strided_slice %20 {offsets = [48, 0], sizes = [8, 32], strides = [1, 1]} : vector<64x32xf32> to vector<8x32xf32>
    %145 = arith.truncf %143 : vector<8x8xf32> to vector<8x8xbf16>
    %cst_33 = arith.constant dense<0.000000e+00> : vector<8x32xf32>
    %146 = tpu.matmul %145, %21, %cst_33 {dimension_numbers = #tpu.dot_dimension_numbers<[1], [0], [0], [1], [0, 0, 1, 1], [], []>} : vector<8x8xbf16>, vector<8x32xbf16>, vector<8x32xf32> -> vector<8x32xf32>
    %147 = arith.addf %144, %146 : vector<8x32xf32>
    %148 = vector.extract_strided_slice %147 {offsets = [0, 0], sizes = [8, 24], strides = [1, 1]} : vector<8x32xf32> to vector<8x24xf32>
    %149 = arith.negf %148 : vector<8x24xf32>
    %150 = math.exp %149 : vector<8x24xf32>
    %cst_34 = arith.constant 1.000000e+00 : f32
    %151 = vector.broadcast %cst_34 : f32 to vector<8x24xf32>
    %152 = arith.addf %151, %150 : vector<8x24xf32>
    %153 = arith.divf %151, %152 : vector<8x24xf32>
    %154 = vector.extract_strided_slice %147 {offsets = [0, 24], sizes = [8, 8], strides = [1, 1]} : vector<8x32xf32> to vector<8x8xf32>
    %155 = math.tanh %154 : vector<8x8xf32>
    %156 = vector.extract_strided_slice %153 {offsets = [0, 0], sizes = [8, 8], strides = [1, 1]} : vector<8x24xf32> to vector<8x8xf32>
    %157 = vector.extract_strided_slice %153 {offsets = [0, 8], sizes = [8, 8], strides = [1, 1]} : vector<8x24xf32> to vector<8x8xf32>
    %158 = vector.extract_strided_slice %153 {offsets = [0, 16], sizes = [8, 8], strides = [1, 1]} : vector<8x24xf32> to vector<8x8xf32>
    %159 = arith.mulf %157, %141 : vector<8x8xf32>
    %160 = arith.mulf %156, %155 : vector<8x8xf32>
    %161 = arith.addf %159, %160 : vector<8x8xf32>
    %162 = math.tanh %161 : vector<8x8xf32>
    %163 = arith.mulf %158, %162 : vector<8x8xf32>
    %164 = vector.extract_strided_slice %20 {offsets = [56, 0], sizes = [8, 32], strides = [1, 1]} : vector<64x32xf32> to vector<8x32xf32>
    %165 = arith.truncf %163 : vector<8x8xf32> to vector<8x8xbf16>
    %cst_35 = arith.constant dense<0.000000e+00> : vector<8x32xf32>
    %166 = tpu.matmul %165, %21, %cst_35 {dimension_numbers = #tpu.dot_dimension_numbers<[1], [0], [0], [1], [0, 0, 1, 1], [], []>} : vector<8x8xbf16>, vector<8x32xbf16>, vector<8x32xf32> -> vector<8x32xf32>
    %167 = arith.addf %164, %166 : vector<8x32xf32>
    %168 = vector.extract_strided_slice %167 {offsets = [0, 0], sizes = [8, 24], strides = [1, 1]} : vector<8x32xf32> to vector<8x24xf32>
    %169 = arith.negf %168 : vector<8x24xf32>
    %170 = math.exp %169 : vector<8x24xf32>
    %cst_36 = arith.constant 1.000000e+00 : f32
    %171 = vector.broadcast %cst_36 : f32 to vector<8x24xf32>
    %172 = arith.addf %171, %170 : vector<8x24xf32>
    %173 = arith.divf %171, %172 : vector<8x24xf32>
    %174 = vector.extract_strided_slice %167 {offsets = [0, 24], sizes = [8, 8], strides = [1, 1]} : vector<8x32xf32> to vector<8x8xf32>
    %175 = math.tanh %174 : vector<8x8xf32>
    %176 = vector.extract_strided_slice %173 {offsets = [0, 0], sizes = [8, 8], strides = [1, 1]} : vector<8x24xf32> to vector<8x8xf32>
    %177 = vector.extract_strided_slice %173 {offsets = [0, 8], sizes = [8, 8], strides = [1, 1]} : vector<8x24xf32> to vector<8x8xf32>
    %178 = vector.extract_strided_slice %173 {offsets = [0, 16], sizes = [8, 8], strides = [1, 1]} : vector<8x24xf32> to vector<8x8xf32>
    %179 = arith.mulf %177, %161 : vector<8x8xf32>
    %180 = arith.mulf %176, %175 : vector<8x8xf32>
    %181 = arith.addf %179, %180 : vector<8x8xf32>
    %182 = math.tanh %181 : vector<8x8xf32>
    %183 = arith.mulf %178, %182 : vector<8x8xf32>
    %184 = arith.truncf %183 : vector<8x8xf32> to vector<8x8xbf16>
    %c0_37 = arith.constant 0 : index
    %c0_38 = arith.constant 0 : index
    %185 = vector.load %arg9[%c0_37, %c0_38] : memref<8x128xbf16, #tpu.memory_space<vmem>>, vector<8x128xbf16>
    %cst_39 = arith.constant dense<0.000000e+00> : vector<8x128xf32>
    %186 = tpu.matmul %184, %185, %cst_39 {dimension_numbers = #tpu.dot_dimension_numbers<[1], [0], [0], [1], [0, 0, 1, 1], [], []>} : vector<8x8xbf16>, vector<8x128xbf16>, vector<8x128xf32> -> vector<8x128xf32>
    %c0_40 = arith.constant 0 : index
    %c0_41 = arith.constant 0 : index
    %187 = vector.load %arg10[%c0_40, %c0_41] : memref<1x128xf32, #tpu.memory_space<vmem>>, vector<1x128xf32>
    %188 = vector.broadcast %187 : vector<1x128xf32> to vector<8x128xf32>
    %189 = arith.addf %186, %188 : vector<8x128xf32>
    %c0_42 = arith.constant 0 : index
    %c0_43 = arith.constant 0 : index
    %190 = vector.load %arg11[%c0_42, %c0_43] : memref<8x128xf32, #tpu.memory_space<vmem>>, vector<8x128xf32>
    tpu.vector_store %arg11[%c0_42, %c0_43], %189 {strides = array<i32>} : memref<8x128xf32, #tpu.memory_space<vmem>>, vector<8x128xf32>,
    return
  }
  func.func @transform_0(%arg0: i32) -> (i32, i32, i32) {
    %c0_i32 = arith.constant 0 : i32
    %c0_i32_0 = arith.constant 0 : i32
    %c0_i32_1 = arith.constant 0 : i32
    return %arg0, %c0_i32, %c0_i32_0 : i32, i32, i32
  }
  func.func @transform_1(%arg0: i32) -> (i32, i32) {
    %c0_i32 = arith.constant 0 : i32
    %c0_i32_0 = arith.constant 0 : i32
    %c0_i32_1 = arith.constant 0 : i32
    return %c0_i32, %c0_i32_0 : i32, i32
  }
  func.func @transform_2(%arg0: i32) -> (i32, i32) {
    %c0_i32 = arith.constant 0 : i32
    %c0_i32_0 = arith.constant 0 : i32
    %c0_i32_1 = arith.constant 0 : i32
    return %c0_i32, %c0_i32_0 : i32, i32
  }
  func.func @transform_3(%arg0: i32) -> (i32, i32) {
    %c0_i32 = arith.constant 0 : i32
    %c0_i32_0 = arith.constant 0 : i32
    %c0_i32_1 = arith.constant 0 : i32
    return %c0_i32, %c0_i32_0 : i32, i32
  }
  func.func @transform_4(%arg0: i32) -> (i32, i32) {
    %c0_i32 = arith.constant 0 : i32
    %c0_i32_0 = arith.constant 0 : i32
    %c0_i32_1 = arith.constant 0 : i32
    return %c0_i32, %c0_i32_0 : i32, i32
  }
  func.func @transform_5(%arg0: i32) -> (i32, i32) {
    %c0_i32 = arith.constant 0 : i32
    %c0_i32_0 = arith.constant 0 : i32
    %c0_i32_1 = arith.constant 0 : i32
    return %c0_i32, %c0_i32_0 : i32, i32
  }
  func.func @transform_6(%arg0: i32) -> (i32, i32) {
    %c0_i32 = arith.constant 0 : i32
    %c0_i32_0 = arith.constant 0 : i32
    %c0_i32_1 = arith.constant 0 : i32
    return %c0_i32, %c0_i32_0 : i32, i32
  }
  func.func @transform_7(%arg0: i32) -> (i32, i32) {
    %c0_i32 = arith.constant 0 : i32
    %c0_i32_0 = arith.constant 0 : i32
    %c0_i32_1 = arith.constant 0 : i32
    return %c0_i32, %c0_i32_0 : i32, i32
  }
  func.func @transform_8(%arg0: i32) -> (i32, i32) {
    %c0_i32 = arith.constant 0 : i32
    %c0_i32_0 = arith.constant 0 : i32
    %c0_i32_1 = arith.constant 0 : i32
    return %c0_i32, %c0_i32_0 : i32, i32
  }
  func.func @transform_9(%arg0: i32) -> (i32, i32) {
    %c0_i32 = arith.constant 0 : i32
    %c0_i32_0 = arith.constant 0 : i32
    %c0_i32_1 = arith.constant 0 : i32
    return %c0_i32, %c0_i32_0 : i32, i32
  }
  func.func @transform_10(%arg0: i32) -> (i32, i32) {
    %c0_i32 = arith.constant 0 : i32
    %c0_i32_0 = arith.constant 0 : i32
    return %arg0, %c0_i32 : i32, i32
  }
}

</mosaic_0001>

<llo_original>
// kernel: cnn_lstm_forward.1
$region0: #{cnn_lstm_forward.1}
  #allocation0 [shape = 'u32[]', space=smem, size = 0x4, offset = 0x4, fixed_abs, tag = 'smem constant byte address 0x4 - core index']
  #allocation1 [shape = 'u32[144,128]{1,0:T(1,128)}', space=vmem, size = 0x12000, scoped, tag = 'internal scratch']
  %s0 = inlined_call_operand.vmem [shape: bf16[1,64,16], index: 0, kind: input, shape index: {}]
  %s1 = inlined_call_operand.vmem [shape: bf16[16,56], index: 1, kind: input, shape index: {}]
  %s2 = inlined_call_operand.vmem [shape: f32[1,56], index: 2, kind: input, shape index: {}]
  %s3 = inlined_call_operand.vmem [shape: bf16[56,8], index: 3, kind: input, shape index: {}]
  %s4 = inlined_call_operand.vmem [shape: f32[1,8], index: 4, kind: input, shape index: {}]
  %s5 = inlined_call_operand.vmem [shape: bf16[8,32], index: 5, kind: input, shape index: {}]
  %s6 = inlined_call_operand.vmem [shape: f32[1,32], index: 6, kind: input, shape index: {}]
  %s7 = inlined_call_operand.vmem [shape: bf16[8,32], index: 7, kind: input, shape index: {}]
  %s8 = inlined_call_operand.vmem [shape: bf16[8,128], index: 8, kind: input, shape index: {}]
  %s9 = inlined_call_operand.vmem [shape: f32[1,128], index: 9, kind: input, shape index: {}]
  %s10 = inlined_call_operand.vmem [shape: f32[8,128], index: 10, kind: output, shape index: {}]
  %s11 = sld [smem:[#allocation0]]
  $region50: #{cnn_lstm_forward.1} parent=0
    _
  %s13 = ssub.s32 1, %s11
  %s14 = scalar_select 0, %s13, %s11
  // Predicated region
  $region2: #{cnn_lstm_forward.1} parent=0 // pred_check
    _
  $region3: #{cnn_lstm_forward.1} parent=0 // pred_check_branch
    %16 = sbr.rel (0) target = $region5
  $region4: #{cnn_lstm_forward.1} parent=0 // pred_region
    _
  $region5: #{cnn_lstm_forward.1} parent=0 // pred_fallthru
    _
  // Predicated region
  $region6: #{cnn_lstm_forward.1} parent=0 // pred_check
    _
  $region7: #{cnn_lstm_forward.1} parent=0 // pred_check_branch
    %18 = sbr.rel (0) target = $region9
  $region8: #{cnn_lstm_forward.1} parent=0 // pred_region
    _
  $region9: #{cnn_lstm_forward.1} parent=0 // pred_fallthru
    _
  // Predicated region
  $region10: #{cnn_lstm_forward.1} parent=0 // pred_check
    _
  $region11: #{cnn_lstm_forward.1} parent=0 // pred_check_branch
    %20 = sbr.rel (0) target = $region13
  $region12: #{cnn_lstm_forward.1} parent=0 // pred_region
    _
  $region13: #{cnn_lstm_forward.1} parent=0 // pred_fallthru
    _
  // Predicated region
  $region14: #{cnn_lstm_forward.1} parent=0 // pred_check
    _
  $region15: #{cnn_lstm_forward.1} parent=0 // pred_check_branch
    %22 = sbr.rel (0) target = $region17
  $region16: #{cnn_lstm_forward.1} parent=0 // pred_region
    _
  $region17: #{cnn_lstm_forward.1} parent=0 // pred_fallthru
    _
  // Predicated region
  $region18: #{cnn_lstm_forward.1} parent=0 // pred_check
    _
  $region19: #{cnn_lstm_forward.1} parent=0 // pred_check_branch
    %24 = sbr.rel (0) target = $region21
  $region20: #{cnn_lstm_forward.1} parent=0 // pred_region
    _
  $region21: #{cnn_lstm_forward.1} parent=0 // pred_fallthru
    _
  // Predicated region
  $region22: #{cnn_lstm_forward.1} parent=0 // pred_check
    _
  $region23: #{cnn_lstm_forward.1} parent=0 // pred_check_branch
    %26 = sbr.rel (0) target = $region25
  $region24: #{cnn_lstm_forward.1} parent=0 // pred_region
    _
  $region25: #{cnn_lstm_forward.1} parent=0 // pred_fallthru
    _
  // Predicated region
  $region26: #{cnn_lstm_forward.1} parent=0 // pred_check
    _
  $region27: #{cnn_lstm_forward.1} parent=0 // pred_check_branch
    %28 = sbr.rel (0) target = $region29
  $region28: #{cnn_lstm_forward.1} parent=0 // pred_region
    _
  $region29: #{cnn_lstm_forward.1} parent=0 // pred_fallthru
    _
  // Predicated region
  $region30: #{cnn_lstm_forward.1} parent=0 // pred_check
    _
  $region31: #{cnn_lstm_forward.1} parent=0 // pred_check_branch
    %30 = sbr.rel (0) target = $region33
  $region32: #{cnn_lstm_forward.1} parent=0 // pred_region
    _
  $region33: #{cnn_lstm_forward.1} parent=0 // pred_fallthru
    _
  // Predicated region
  $region34: #{cnn_lstm_forward.1} parent=0 // pred_check
    _
  $region35: #{cnn_lstm_forward.1} parent=0 // pred_check_branch
    %32 = sbr.rel (0) target = $region37
  $region36: #{cnn_lstm_forward.1} parent=0 // pred_region
    _
  $region37: #{cnn_lstm_forward.1} parent=0 // pred_fallthru
    _
  // Predicated region
  $region38: #{cnn_lstm_forward.1} parent=0 // pred_check
    _
  $region39: #{cnn_lstm_forward.1} parent=0 // pred_check_branch
    %34 = sbr.rel (0) target = $region41
  $region40: #{cnn_lstm_forward.1} parent=0 // pred_region
    _
  $region41: #{cnn_lstm_forward.1} parent=0 // pred_fallthru
    _
  %v36 = vld [vmem:[%s0] sm:$0xf]
  %v37 = vld [vmem:[%s0 + $0x4] sm:$0xf]
  %v38 = vld [vmem:[%s0 + $0x8] sm:$0xf]
  %v39 = vld [vmem:[%s0 + $0xc] sm:$0xf]
  %v40 = vld [vmem:[%s0 + $0x10] sm:$0xf]
  %v41 = vld [vmem:[%s0 + $0x14] sm:$0xf]
  %v42 = vld [vmem:[%s0 + $0x18] sm:$0xf]
  %v43 = vld [vmem:[%s0 + $0x1c] sm:$0xf]
  %v44 = vld [vmem:[%s1] sm:$0xf]
  %v45 = vld [vmem:[%s1 + $0x4] sm:$0xf]
  %v46 = vld [vmem:[%s2] sm:$0x1]
  %v48 = vlaneseq
  %v49 = vshrl.u32 %v48, 7
  %v50 = vsub.s32 0, %v49
  %v51 = vrot.slane %v46, %v50
  %v61 = vunpack.c.l.b16 %v36
  %v62 = vunpack.c.l.b16 %v37
  %v63 = vunpack.c.l.b16 %v38
  %v64 = vunpack.c.l.b16 %v39
  %v65 = vunpack.c.l.b16 %v40
  %v66 = vunpack.c.l.b16 %v41
  %v67 = vunpack.c.l.b16 %v42
  %v68 = vunpack.c.l.b16 %v43
  %v69 = vpack.c.b16 %v62, %v61
  %v70 = vpack.c.b16 %v64, %v63
  %v71 = vpack.c.b16 %v66, %v65
  %v72 = vpack.c.b16 %v68, %v67
  %v75 = vunpack.c.l.b16 %v44
  %v76 = vunpack.c.l.b16 %v45
  %v77 = vpack.c.b16 %v76, %v75
  %vm79 = vcmask 130048
  %v81 = vsel %vm79, %v69, 0
  %v84 = vsel %vm79, %v70, 0
  %v87 = vsel %vm79, %v71, 0
  %v90 = vsel %vm79, %v72, 0
  %92 = vmatprep.subr.bf16.mxu0 0
  %93 = vmatpush1.bf16.msra.mxu0 %v77
  %94 = vmatprep.subr.bf16.mxu0 0
  %95 = vmatpush1.bf16.msra.mxu0 0
  %96 = vmatprep.subr.bf16.mxu0 0
  %97 = vmatpush1.bf16.msra.mxu0 0
  %98 = vmatprep.subr.bf16.mxu0 0
  %99 = vmatpush1.bf16.msra.mxu0 0
  %100 = vmatprep.subr.bf16.mxu0 0
  %101 = vmatpush1.bf16.msra.mxu0 0
  %102 = vmatprep.subr.bf16.mxu0 0
  %103 = vmatpush1.bf16.msra.mxu0 0
  %104 = vmatprep.subr.bf16.mxu0 0
  %105 = vmatpush1.bf16.msra.mxu0 0
  %106 = vmatprep.subr.bf16.mxu0 0
  %107 = vmatpush1.bf16.msra.mxu0 0
  %108 = vmatprep.subr.bf16.mxu0 0
  %109 = vmatpush1.bf16.msra.mxu0 0
  %110 = vmatprep.subr.bf16.mxu0 0
  %111 = vmatpush1.bf16.msra.mxu0 0
  %112 = vmatprep.subr.bf16.mxu0 0
  %113 = vmatpush1.bf16.msra.mxu0 0
  %114 = vmatprep.subr.bf16.mxu0 0
  %115 = vmatpush1.bf16.msra.mxu0 0
  %116 = vmatprep.subr.bf16.mxu0 0
  %117 = vmatpush1.bf16.msra.mxu0 0
  %118 = vmatprep.subr.bf16.mxu0 0
  %119 = vmatpush1.bf16.msra.mxu0 0
  %120 = vmatprep.subr.bf16.mxu0 0
  %121 = vmatpush1.bf16.msra.mxu0 0
  %122 = vmatprep.subr.bf16.mxu0 0
  %123 = vmatpush1.bf16.msra.mxu0 0
  %124 = vmatprep.mubr.bf16.mxu0 0
  %125 = vmatmul.mubr.bf16.gmra.mrb[0].mxu0 %v81
  %v126 = vpop.f32.mrb[0].mxu0
  %v127 = vadd.f32 %v51, %v126
  %v128 = vpop.f32.mrb[0].mxu0
  %v129 = vpop.f32.mrb[0].mxu0
  %v130 = vadd.f32 %v51, %v129
  %v131 = vpop.f32.mrb[0].mxu0
  %132 = vmatprep.mubr.bf16.mxu0 0
  %133 = vmatmul.mubr.bf16.gmra.mrb[0].mxu0 %v84
  %v134 = vpop.f32.mrb[0].mxu0
  %v135 = vadd.f32 %v51, %v134
  %v136 = vpop.f32.mrb[0].mxu0
  %v137 = vpop.f32.mrb[0].mxu0
  %v138 = vadd.f32 %v51, %v137
  %v139 = vpop.f32.mrb[0].mxu0
  %140 = vmatprep.mubr.bf16.mxu0 0
  %141 = vmatmul.mubr.bf16.gmra.mrb[0].mxu0 %v87
  %v142 = vpop.f32.mrb[0].mxu0
  %v143 = vadd.f32 %v51, %v142
  %v144 = vpop.f32.mrb[0].mxu0
  %v145 = vpop.f32.mrb[0].mxu0
  %v146 = vadd.f32 %v51, %v145
  %v147 = vpop.f32.mrb[0].mxu0
  %148 = vmatprep.mubr.bf16.mxu0 0
  %149 = vmatmul.mubr.bf16.gmra.mrb[0].mxu0 %v90
  %v150 = vpop.f32.mrb[0].mxu0
  %v151 = vadd.f32 %v51, %v150
  %v152 = vpop.f32.mrb[0].mxu0
  %v153 = vpop.f32.mrb[0].mxu0
  %v154 = vadd.f32 %v51, %v153
  %v155 = vpop.f32.mrb[0].mxu0
  %156 = vdwg.mxu0
  %v157 = vmax.f32 %v127, 0.0
  %v158 = vmax.f32 %v130, 0.0
  %v159 = vmax.f32 %v135, 0.0
  %v160 = vmax.f32 %v138, 0.0
  %v161 = vmax.f32 %v143, 0.0
  %v162 = vmax.f32 %v146, 0.0
  %v163 = vmax.f32 %v151, 0.0
  %v164 = vmax.f32 %v154, 0.0
  %v165 = vpack.c.bf16 %v158, %v157
  %v166 = vpack.c.bf16 %v160, %v159
  %v167 = vpack.c.bf16 %v162, %v161
  %v168 = vpack.c.bf16 %v164, %v163
  %v169 = vld [vmem:[%s3] sm:$0xf]
  %v170 = vld [vmem:[%s3 + $0x4] sm:$0xf]
  %v171 = vld [vmem:[%s3 + $0x8] sm:$0xf]
  %v172 = vld [vmem:[%s3 + $0xc] sm:$0xf]
  %v173 = vld [vmem:[%s3 + $0x10] sm:$0xf]
  %v174 = vld [vmem:[%s3 + $0x14] sm:$0xf]
  %v175 = vld [vmem:[%s3 + $0x18] sm:$0xf]
  %v176 = vld [vmem:[%s4] sm:$0x1]
  %v178 = vlaneseq
  %v179 = vshrl.u32 %v178, 7
  %v180 = vsub.s32 0, %v179
  %v181 = vrot.slane %v176, %v180
  %v190 = vunpack.c.l.b16 %v169
  %v191 = vunpack.c.l.b16 %v170
  %v192 = vunpack.c.l.b16 %v171
  %v193 = vunpack.c.l.b16 %v172
  %v194 = vunpack.c.l.b16 %v173
  %v195 = vunpack.c.l.b16 %v174
  %v196 = vunpack.c.l.b16 %v175
  %v197 = vpack.c.b16 %v191, %v190
  %v198 = vpack.c.b16 %v193, %v192
  %v199 = vpack.c.b16 %v195, %v194
  %v200 = vpack.c.b16 %v196, %v196
  %vm204 = vcmask 457728
  %v206 = vsel %vm204, %v165, 0
  %v209 = vsel %vm204, %v166, 0
  %v212 = vsel %vm204, %v167, 0
  %v215 = vsel %vm204, %v168, 0
  %vm217 = vcmask 1043456
  %v219 = vsel %vm217, %v200, 0
  %221 = vmatprep.subr.bf16.mxu0 0
  %222 = vmatpush1.bf16.msra.mxu0 %v197
  %223 = vmatprep.subr.bf16.mxu0 0
  %224 = vmatpush1.bf16.msra.mxu0 %v198
  %225 = vmatprep.subr.bf16.mxu0 0
  %226 = vmatpush1.bf16.msra.mxu0 %v199
  %227 = vmatprep.subr.bf16.mxu0 0
  %228 = vmatpush1.bf16.msra.mxu0 %v219
  %229 = vmatprep.subr.bf16.mxu0 0
  %230 = vmatpush1.bf16.msra.mxu0 0
  %231 = vmatprep.subr.bf16.mxu0 0
  %232 = vmatpush1.bf16.msra.mxu0 0
  %233 = vmatprep.subr.bf16.mxu0 0
  %234 = vmatpush1.bf16.msra.mxu0 0
  %235 = vmatprep.subr.bf16.mxu0 0
  %236 = vmatpush1.bf16.msra.mxu0 0
  %237 = vmatprep.subr.bf16.mxu0 0
  %238 = vmatpush1.bf16.msra.mxu0 0
  %239 = vmatprep.subr.bf16.mxu0 0
  %240 = vmatpush1.bf16.msra.mxu0 0
  %241 = vmatprep.subr.bf16.mxu0 0
  %242 = vmatpush1.bf16.msra.mxu0 0
  %243 = vmatprep.subr.bf16.mxu0 0
  %244 = vmatpush1.bf16.msra.mxu0 0
  %245 = vmatprep.subr.bf16.mxu0 0
  %246 = vmatpush1.bf16.msra.mxu0 0
  %247 = vmatprep.subr.bf16.mxu0 0
  %248 = vmatpush1.bf16.msra.mxu0 0
  %249 = vmatprep.subr.bf16.mxu0 0
  %250 = vmatpush1.bf16.msra.mxu0 0
  %251 = vmatprep.subr.bf16.mxu0 0
  %252 = vmatpush1.bf16.msra.mxu0 0
  %253 = vmatprep.mubr.bf16.mxu0 0
  %254 = vmatmul.mubr.bf16.gmra.mrb[0].mxu0 %v206
  %v255 = vpop.f32.mrb[0].mxu0
  %v256 = vadd.f32 %v181, %v255
  %v257 = vpop.f32.mrb[0].mxu0
  %v258 = vpop.f32.mrb[0].mxu0
  %v259 = vadd.f32 %v181, %v258
  %v260 = vpop.f32.mrb[0].mxu0
  %261 = vmatprep.mubr.bf16.mxu0 0
  %262 = vmatmul.mubr.bf16.gmra.mrb[0].mxu0 %v209
  %v263 = vpop.f32.mrb[0].mxu0
  %v264 = vadd.f32 %v181, %v263
  %v265 = vpop.f32.mrb[0].mxu0
  %v266 = vpop.f32.mrb[0].mxu0
  %v267 = vadd.f32 %v181, %v266
  %v268 = vpop.f32.mrb[0].mxu0
  %269 = vmatprep.mubr.bf16.mxu0 0
  %270 = vmatmul.mubr.bf16.gmra.mrb[0].mxu0 %v212
  %v271 = vpop.f32.mrb[0].mxu0
  %v272 = vadd.f32 %v181, %v271
  %v273 = vpop.f32.mrb[0].mxu0
  %v274 = vpop.f32.mrb[0].mxu0
  %v275 = vadd.f32 %v181, %v274
  %v276 = vpop.f32.mrb[0].mxu0
  %277 = vmatprep.mubr.bf16.mxu0 0
  %278 = vmatmul.mubr.bf16.gmra.mrb[0].mxu0 %v215
  %v279 = vpop.f32.mrb[0].mxu0
  %v280 = vadd.f32 %v181, %v279
  %v281 = vpop.f32.mrb[0].mxu0
  %v282 = vpop.f32.mrb[0].mxu0
  %v283 = vadd.f32 %v181, %v282
  %v284 = vpop.f32.mrb[0].mxu0
  %285 = vdwg.mxu0
  %v286 = vpack.c.bf16 %v259, %v256
  %v287 = vpack.c.bf16 %v267, %v264
  %v288 = vpack.c.bf16 %v275, %v272
  %v289 = vpack.c.bf16 %v283, %v280
  %v290 = vld [vmem:[%s5] sm:$0xf]
  %v291 = vld [vmem:[%s6] sm:$0x1]
  %v293 = vlaneseq
  %v294 = vshrl.u32 %v293, 7
  %v295 = vsub.s32 0, %v294
  %v296 = vrot.slane %v291, %v295
  %vm298 = vcmask 64512
  %v300 = vsel %vm298, %v286, 0
  %v303 = vsel %vm298, %v287, 0
  %v306 = vsel %vm298, %v288, 0
  %v309 = vsel %vm298, %v289, 0
  %v312 = vsel %vm217, %v290, 0
  %314 = vmatprep.subr.bf16.mxu0 0
  %315 = vmatpush1.bf16.msra.mxu0 %v312
  %316 = vmatprep.subr.bf16.mxu0 0
  %317 = vmatpush1.bf16.msra.mxu0 0
  %318 = vmatprep.subr.bf16.mxu0 0
  %319 = vmatpush1.bf16.msra.mxu0 0
  %320 = vmatprep.subr.bf16.mxu0 0
  %321 = vmatpush1.bf16.msra.mxu0 0
  %322 = vmatprep.subr.bf16.mxu0 0
  %323 = vmatpush1.bf16.msra.mxu0 0
  %324 = vmatprep.subr.bf16.mxu0 0
  %325 = vmatpush1.bf16.msra.mxu0 0
  %326 = vmatprep.subr.bf16.mxu0 0
  %327 = vmatpush1.bf16.msra.mxu0 0
  %328 = vmatprep.subr.bf16.mxu0 0
  %329 = vmatpush1.bf16.msra.mxu0 0
  %330 = vmatprep.subr.bf16.mxu0 0
  %331 = vmatpush1.bf16.msra.mxu0 0
  %332 = vmatprep.subr.bf16.mxu0 0
  %333 = vmatpush1.bf16.msra.mxu0 0
  %334 = vmatprep.subr.bf16.mxu0 0
  %335 = vmatpush1.bf16.msra.mxu0 0
  %336 = vmatprep.subr.bf16.mxu0 0
  %337 = vmatpush1.bf16.msra.mxu0 0
  %338 = vmatprep.subr.bf16.mxu0 0
  %339 = vmatpush1.bf16.msra.mxu0 0
  %340 = vmatprep.subr.bf16.mxu0 0
  %341 = vmatpush1.bf16.msra.mxu0 0
  %342 = vmatprep.subr.bf16.mxu0 0
  %343 = vmatpush1.bf16.msra.mxu0 0
  %344 = vmatprep.subr.bf16.mxu0 0
  %345 = vmatpush1.bf16.msra.mxu0 0
  %346 = vmatprep.mubr.bf16.mxu0 0
  %347 = vmatmul.mubr.bf16.gmra.mrb[0].mxu0 %v300
  %v348 = vpop.f32.mrb[0].mxu0
  %v349 = vadd.f32 %v296, %v348
  %v350 = vpop.f32.mrb[0].mxu0
  %v351 = vpop.f32.mrb[0].mxu0
  %v352 = vadd.f32 %v296, %v351
  %v353 = vpop.f32.mrb[0].mxu0
  %354 = vmatprep.mubr.bf16.mxu0 0
  %355 = vmatmul.mubr.bf16.gmra.mrb[0].mxu0 %v303
  %v356 = vpop.f32.mrb[0].mxu0
  %v357 = vadd.f32 %v296, %v356
  %v358 = vpop.f32.mrb[0].mxu0
  %v359 = vpop.f32.mrb[0].mxu0
  %v360 = vadd.f32 %v296, %v359
  %v361 = vpop.f32.mrb[0].mxu0
  %362 = vmatprep.mubr.bf16.mxu0 0
  %363 = vmatmul.mubr.bf16.gmra.mrb[0].mxu0 %v306
  %v364 = vpop.f32.mrb[0].mxu0
  %v365 = vadd.f32 %v296, %v364
  %v366 = vpop.f32.mrb[0].mxu0
  %v367 = vpop.f32.mrb[0].mxu0
  %v368 = vadd.f32 %v296, %v367
  %v369 = vpop.f32.mrb[0].mxu0
  %370 = vmatprep.mubr.bf16.mxu0 0
  %371 = vmatmul.mubr.bf16.gmra.mrb[0].mxu0 %v309
  %v372 = vpop.f32.mrb[0].mxu0
  %v373 = vadd.f32 %v296, %v372
  %v374 = vpop.f32.mrb[0].mxu0
  %v375 = vpop.f32.mrb[0].mxu0
  %v376 = vadd.f32 %v296, %v375
  %v377 = vpop.f32.mrb[0].mxu0
  %378 = vdwg.mxu0
  %v379 = vld [vmem:[%s7] sm:$0xf]
  %v381 = vsel %vm298, 0, 0
  %v384 = vsel %vm217, %v379, 0
  %386 = vmatprep.subr.bf16.mxu0 0
  %387 = vmatpush1.bf16.msra.mxu0 %v384
  %388 = vmatprep.subr.bf16.mxu0 0
  %389 = vmatpush1.bf16.msra.mxu0 0
  %390 = vmatprep.subr.bf16.mxu0 0
  %391 = vmatpush1.bf16.msra.mxu0 0
  %392 = vmatprep.subr.bf16.mxu0 0
  %393 = vmatpush1.bf16.msra.mxu0 0
  %394 = vmatprep.subr.bf16.mxu0 0
  %395 = vmatpush1.bf16.msra.mxu0 0
  %396 = vmatprep.subr.bf16.mxu0 0
  %397 = vmatpush1.bf16.msra.mxu0 0
  %398 = vmatprep.subr.bf16.mxu0 0
  %399 = vmatpush1.bf16.msra.mxu0 0
  %400 = vmatprep.subr.bf16.mxu0 0
  %401 = vmatpush1.bf16.msra.mxu0 0
  %402 = vmatprep.subr.bf16.mxu0 0
  %403 = vmatpush1.bf16.msra.mxu0 0
  %404 = vmatprep.subr.bf16.mxu0 0
  %405 = vmatpush1.bf16.msra.mxu0 0
  %406 = vmatprep.subr.bf16.mxu0 0
  %407 = vmatpush1.bf16.msra.mxu0 0
  %408 = vmatprep.subr.bf16.mxu0 0
  %409 = vmatpush1.bf16.msra.mxu0 0
  %410 = vmatprep.subr.bf16.mxu0 0
  %411 = vmatpush1.bf16.msra.mxu0 0
  %412 = vmatprep.subr.bf16.mxu0 0
  %413 = vmatpush1.bf16.msra.mxu0 0
  %414 = vmatprep.subr.bf16.mxu0 0
  %415 = vmatpush1.bf16.msra.mxu0 0
  %416 = vmatprep.subr.bf16.mxu0 0
  %417 = vmatpush1.bf16.msra.mxu0 0
  %418 = vmatprep.mubr.bf16.mxu0 0
  %419 = vmatmul.mubr.bf16.gmra.mrb[0].mxu0 %v381
  %v420 = vpop.f32.mrb[0].mxu0
  %v421 = vadd.f32 0.0, %v420
  %v422 = vpop.f32.mrb[0].mxu0
  %v423 = vpop.f32.mrb[0].mxu0
  %v424 = vpop.f32.mrb[0].mxu0
  %425 = vdwg.mxu0
  %v426 = vadd.f32 %v349, %v421
  %v427 = vxor.u32 %v426, 2147483648
  %v428 = vmul.f32 %v427, 1.442695
  %v429 = vpow.pop %v428
  %v430 = vadd.f32 %v429, 1.0
  %v431 = vrcp.pop %v430
  %v432 = vmul.f32 1.0, %v431
  %v433 = vtanh.pop %v426
  %v434 = vmul.f32 %v432, 0.0
  %436 = vrot.lane.b32.xlu0 %v433, 104
  %v437 = vpop.permute.xlu0 %436
  %v439 = vmul.f32 %v432, %v437
  %441 = vrot.lane.b32.xlu0 %v439, 8
  %v442 = vpop.permute.xlu0 %441
  %v444 = vadd.f32 %v434, %v442
  %v445 = vtanh.pop %v444
  %447 = vrot.lane.b32.xlu0 %v445, 8
  %v448 = vpop.permute.xlu0 %447
  %v450 = vmul.f32 %v432, %v448
  %v451 = vpack.c.bf16 %v450, %v450
  %453 = vrot.lane.b32.xlu0 %v451, 112
  %v454 = vpop.permute.xlu0 %453
  %v456 = vsel %vm298, %v454, 0
  %458 = vmatprep.subr.bf16.mxu0 0
  %459 = vmatpush1.bf16.msra.mxu0 %v384
  %460 = vmatprep.subr.bf16.mxu0 0
  %461 = vmatpush1.bf16.msra.mxu0 0
  %462 = vmatprep.subr.bf16.mxu0 0
  %463 = vmatpush1.bf16.msra.mxu0 0
  %464 = vmatprep.subr.bf16.mxu0 0
  %465 = vmatpush1.bf16.msra.mxu0 0
  %466 = vmatprep.subr.bf16.mxu0 0
  %467 = vmatpush1.bf16.msra.mxu0 0
  %468 = vmatprep.subr.bf16.mxu0 0
  %469 = vmatpush1.bf16.msra.mxu0 0
  %470 = vmatprep.subr.bf16.mxu0 0
  %471 = vmatpush1.bf16.msra.mxu0 0
  %472 = vmatprep.subr.bf16.mxu0 0
  %473 = vmatpush1.bf16.msra.mxu0 0
  %474 = vmatprep.subr.bf16.mxu0 0
  %475 = vmatpush1.bf16.msra.mxu0 0
  %476 = vmatprep.subr.bf16.mxu0 0
  %477 = vmatpush1.bf16.msra.mxu0 0
  %478 = vmatprep.subr.bf16.mxu0 0
  %479 = vmatpush1.bf16.msra.mxu0 0
  %480 = vmatprep.subr.bf16.mxu0 0
  %481 = vmatpush1.bf16.msra.mxu0 0
  %482 = vmatprep.subr.bf16.mxu0 0
  %483 = vmatpush1.bf16.msra.mxu0 0
  %484 = vmatprep.subr.bf16.mxu0 0
  %485 = vmatpush1.bf16.msra.mxu0 0
  %486 = vmatprep.subr.bf16.mxu0 0
  %487 = vmatpush1.bf16.msra.mxu0 0
  %488 = vmatprep.subr.bf16.mxu0 0
  %489 = vmatpush1.bf16.msra.mxu0 0
  %490 = vmatprep.mubr.bf16.mxu0 0
  %491 = vmatmul.mubr.bf16.gmra.mrb[0].mxu0 %v456
  %v492 = vpop.f32.mrb[0].mxu0
  %v493 = vadd.f32 0.0, %v492
  %v494 = vpop.f32.mrb[0].mxu0
  %v495 = vpop.f32.mrb[0].mxu0
  %v496 = vpop.f32.mrb[0].mxu0
  %497 = vdwg.mxu0
  %v498 = vadd.f32 %v352, %v493
  %v499 = vxor.u32 %v498, 2147483648
  %v500 = vmul.f32 %v499, 1.442695
  %v501 = vpow.pop %v500
  %v502 = vadd.f32 %v501, 1.0
  %v503 = vrcp.pop %v502
  %v504 = vmul.f32 1.0, %v503
  %v505 = vtanh.pop %v498
  %v506 = vmul.f32 %v504, %v444
  %508 = vrot.lane.b32.xlu0 %v505, 104
  %v509 = vpop.permute.xlu0 %508
  %v511 = vmul.f32 %v504, %v509
  %513 = vrot.lane.b32.xlu0 %v511, 8
  %v514 = vpop.permute.xlu0 %513
  %v516 = vadd.f32 %v506, %v514
  %v517 = vtanh.pop %v516
  %519 = vrot.lane.b32.xlu0 %v517, 8
  %v520 = vpop.permute.xlu0 %519
  %v522 = vmul.f32 %v504, %v520
  %v523 = vpack.c.bf16 %v522, %v522
  %525 = vrot.lane.b32.xlu0 %v523, 112
  %v526 = vpop.permute.xlu0 %525
  %v528 = vsel %vm298, %v526, 0
  %530 = vmatprep.subr.bf16.mxu0 0
  %531 = vmatpush1.bf16.msra.mxu0 %v384
  %532 = vmatprep.subr.bf16.mxu0 0
  %533 = vmatpush1.bf16.msra.mxu0 0
  %534 = vmatprep.subr.bf16.mxu0 0
  %535 = vmatpush1.bf16.msra.mxu0 0
  %536 = vmatprep.subr.bf16.mxu0 0
  %537 = vmatpush1.bf16.msra.mxu0 0
  %538 = vmatprep.subr.bf16.mxu0 0
  %539 = vmatpush1.bf16.msra.mxu0 0
  %540 = vmatprep.subr.bf16.mxu0 0
  %541 = vmatpush1.bf16.msra.mxu0 0
  %542 = vmatprep.subr.bf16.mxu0 0
  %543 = vmatpush1.bf16.msra.mxu0 0
  %544 = vmatprep.subr.bf16.mxu0 0
  %545 = vmatpush1.bf16.msra.mxu0 0
  %546 = vmatprep.subr.bf16.mxu0 0
  %547 = vmatpush1.bf16.msra.mxu0 0
  %548 = vmatprep.subr.bf16.mxu0 0
  %549 = vmatpush1.bf16.msra.mxu0 0
  %550 = vmatprep.subr.bf16.mxu0 0
  %551 = vmatpush1.bf16.msra.mxu0 0
  %552 = vmatprep.subr.bf16.mxu0 0
  %553 = vmatpush1.bf16.msra.mxu0 0
  %554 = vmatprep.subr.bf16.mxu0 0
  %555 = vmatpush1.bf16.msra.mxu0 0
  %556 = vmatprep.subr.bf16.mxu0 0
  %557 = vmatpush1.bf16.msra.mxu0 0
  %558 = vmatprep.subr.bf16.mxu0 0
  %559 = vmatpush1.bf16.msra.mxu0 0
  %560 = vmatprep.subr.bf16.mxu0 0
  %561 = vmatpush1.bf16.msra.mxu0 0
  %562 = vmatprep.mubr.bf16.mxu0 0
  %563 = vmatmul.mubr.bf16.gmra.mrb[0].mxu0 %v528
  %v564 = vpop.f32.mrb[0].mxu0
  %v565 = vadd.f32 0.0, %v564
  %v566 = vpop.f32.mrb[0].mxu0
  %v567 = vpop.f32.mrb[0].mxu0
  %v568 = vpop.f32.mrb[0].mxu0
  %569 = vdwg.mxu0
  %v570 = vadd.f32 %v357, %v565
  %v571 = vxor.u32 %v570, 2147483648
  %v572 = vmul.f32 %v571, 1.442695
  %v573 = vpow.pop %v572
  %v574 = vadd.f32 %v573, 1.0
  %v575 = vrcp.pop %v574
  %v576 = vmul.f32 1.0, %v575
  %v577 = vtanh.pop %v570
  %v578 = vmul.f32 %v576, %v516
  %580 = vrot.lane.b32.xlu0 %v577, 104
  %v581 = vpop.permute.xlu0 %580
  %v583 = vmul.f32 %v576, %v581
  %585 = vrot.lane.b32.xlu0 %v583, 8
  %v586 = vpop.permute.xlu0 %585
  %v588 = vadd.f32 %v578, %v586
  %v589 = vtanh.pop %v588
  %591 = vrot.lane.b32.xlu0 %v589, 8
  %v592 = vpop.permute.xlu0 %591
  %v594 = vmul.f32 %v576, %v592
  %v595 = vpack.c.bf16 %v594, %v594
  %597 = vrot.lane.b32.xlu0 %v595, 112
  %v598 = vpop.permute.xlu0 %597
  %v600 = vsel %vm298, %v598, 0
  %602 = vmatprep.subr.bf16.mxu0 0
  %603 = vmatpush1.bf16.msra.mxu0 %v384
  %604 = vmatprep.subr.bf16.mxu0 0
  %605 = vmatpush1.bf16.msra.mxu0 0
  %606 = vmatprep.subr.bf16.mxu0 0
  %607 = vmatpush1.bf16.msra.mxu0 0
  %608 = vmatprep.subr.bf16.mxu0 0
  %609 = vmatpush1.bf16.msra.mxu0 0
  %610 = vmatprep.subr.bf16.mxu0 0
  %611 = vmatpush1.bf16.msra.mxu0 0
  %612 = vmatprep.subr.bf16.mxu0 0
  %613 = vmatpush1.bf16.msra.mxu0 0
  %614 = vmatprep.subr.bf16.mxu0 0
  %615 = vmatpush1.bf16.msra.mxu0 0
  %616 = vmatprep.subr.bf16.mxu0 0
  %617 = vmatpush1.bf16.msra.mxu0 0
  %618 = vmatprep.subr.bf16.mxu0 0
  %619 = vmatpush1.bf16.msra.mxu0 0
  %620 = vmatprep.subr.bf16.mxu0 0
  %621 = vmatpush1.bf16.msra.mxu0 0
  %622 = vmatprep.subr.bf16.mxu0 0
  %623 = vmatpush1.bf16.msra.mxu0 0
  %624 = vmatprep.subr.bf16.mxu0 0
  %625 = vmatpush1.bf16.msra.mxu0 0
  %626 = vmatprep.subr.bf16.mxu0 0
  %627 = vmatpush1.bf16.msra.mxu0 0
  %628 = vmatprep.subr.bf16.mxu0 0
  %629 = vmatpush1.bf16.msra.mxu0 0
  %630 = vmatprep.subr.bf16.mxu0 0
  %631 = vmatpush1.bf16.msra.mxu0 0
  %632 = vmatprep.subr.bf16.mxu0 0
  %633 = vmatpush1.bf16.msra.mxu0 0
  %634 = vmatprep.mubr.bf16.mxu0 0
  %635 = vmatmul.mubr.bf16.gmra.mrb[0].mxu0 %v600
  %v636 = vpop.f32.mrb[0].mxu0
  %v637 = vadd.f32 0.0, %v636
  %v638 = vpop.f32.mrb[0].mxu0
  %v639 = vpop.f32.mrb[0].mxu0
  %v640 = vpop.f32.mrb[0].mxu0
  %641 = vdwg.mxu0
  %v642 = vadd.f32 %v360, %v637
  %v643 = vxor.u32 %v642, 2147483648
  %v644 = vmul.f32 %v643, 1.442695
  %v645 = vpow.pop %v644
  %v646 = vadd.f32 %v645, 1.0
  %v647 = vrcp.pop %v646
  %v648 = vmul.f32 1.0, %v647
  %v649 = vtanh.pop %v642
  %v650 = vmul.f32 %v648, %v588
  %652 = vrot.lane.b32.xlu0 %v649, 104
  %v653 = vpop.permute.xlu0 %652
  %v655 = vmul.f32 %v648, %v653
  %657 = vrot.lane.b32.xlu0 %v655, 8
  %v658 = vpop.permute.xlu0 %657
  %v660 = vadd.f32 %v650, %v658
  %v661 = vtanh.pop %v660
  %663 = vrot.lane.b32.xlu0 %v661, 8
  %v664 = vpop.permute.xlu0 %663
  %v666 = vmul.f32 %v648, %v664
  %v667 = vpack.c.bf16 %v666, %v666
  %669 = vrot.lane.b32.xlu0 %v667, 112
  %v670 = vpop.permute.xlu0 %669
  %v672 = vsel %vm298, %v670, 0
  %674 = vmatprep.subr.bf16.mxu0 0
  %675 = vmatpush1.bf16.msra.mxu0 %v384
  %676 = vmatprep.subr.bf16.mxu0 0
  %677 = vmatpush1.bf16.msra.mxu0 0
  %678 = vmatprep.subr.bf16.mxu0 0
  %679 = vmatpush1.bf16.msra.mxu0 0
  %680 = vmatprep.subr.bf16.mxu0 0
  %681 = vmatpush1.bf16.msra.mxu0 0
  %682 = vmatprep.subr.bf16.mxu0 0
  %683 = vmatpush1.bf16.msra.mxu0 0
  %684 = vmatprep.subr.bf16.mxu0 0
  %685 = vmatpush1.bf16.msra.mxu0 0
  %686 = vmatprep.subr.bf16.mxu0 0
  %687 = vmatpush1.bf16.msra.mxu0 0
  %688 = vmatprep.subr.bf16.mxu0 0
  %689 = vmatpush1.bf16.msra.mxu0 0
  %690 = vmatprep.subr.bf16.mxu0 0
  %691 = vmatpush1.bf16.msra.mxu0 0
  %692 = vmatprep.subr.bf16.mxu0 0
  %693 = vmatpush1.bf16.msra.mxu0 0
  %694 = vmatprep.subr.bf16.mxu0 0
  %695 = vmatpush1.bf16.msra.mxu0 0
  %696 = vmatprep.subr.bf16.mxu0 0
  %697 = vmatpush1.bf16.msra.mxu0 0
  %698 = vmatprep.subr.bf16.mxu0 0
  %699 = vmatpush1.bf16.msra.mxu0 0
  %700 = vmatprep.subr.bf16.mxu0 0
  %701 = vmatpush1.bf16.msra.mxu0 0
  %702 = vmatprep.subr.bf16.mxu0 0
  %703 = vmatpush1.bf16.msra.mxu0 0
  %704 = vmatprep.subr.bf16.mxu0 0
  %705 = vmatpush1.bf16.msra.mxu0 0
  %706 = vmatprep.mubr.bf16.mxu0 0
  %707 = vmatmul.mubr.bf16.gmra.mrb[0].mxu0 %v672
  %v708 = vpop.f32.mrb[0].mxu0
  %v709 = vadd.f32 0.0, %v708
  %v710 = vpop.f32.mrb[0].mxu0
  %v711 = vpop.f32.mrb[0].mxu0
  %v712 = vpop.f32.mrb[0].mxu0
  %713 = vdwg.mxu0
  %v714 = vadd.f32 %v365, %v709
  %v715 = vxor.u32 %v714, 2147483648
  %v716 = vmul.f32 %v715, 1.442695
  %v717 = vpow.pop %v716
  %v718 = vadd.f32 %v717, 1.0
  %v719 = vrcp.pop %v718
  %v720 = vmul.f32 1.0, %v719
  %v721 = vtanh.pop %v714
  %v722 = vmul.f32 %v720, %v660
  %724 = vrot.lane.b32.xlu0 %v721, 104
  %v725 = vpop.permute.xlu0 %724
  %v727 = vmul.f32 %v720, %v725
  %729 = vrot.lane.b32.xlu0 %v727, 8
  %v730 = vpop.permute.xlu0 %729
  %v732 = vadd.f32 %v722, %v730
  %v733 = vtanh.pop %v732
  %735 = vrot.lane.b32.xlu0 %v733, 8
  %v736 = vpop.permute.xlu0 %735
  %v738 = vmul.f32 %v720, %v736
  %v739 = vpack.c.bf16 %v738, %v738
  %741 = vrot.lane.b32.xlu0 %v739, 112
  %v742 = vpop.permute.xlu0 %741
  %v744 = vsel %vm298, %v742, 0
  %746 = vmatprep.subr.bf16.mxu0 0
  %747 = vmatpush1.bf16.msra.mxu0 %v384
  %748 = vmatprep.subr.bf16.mxu0 0
  %749 = vmatpush1.bf16.msra.mxu0 0
  %750 = vmatprep.subr.bf16.mxu0 0
  %751 = vmatpush1.bf16.msra.mxu0 0
  %752 = vmatprep.subr.bf16.mxu0 0
  %753 = vmatpush1.bf16.msra.mxu0 0
  %754 = vmatprep.subr.bf16.mxu0 0
  %755 = vmatpush1.bf16.msra.mxu0 0
  %756 = vmatprep.subr.bf16.mxu0 0
  %757 = vmatpush1.bf16.msra.mxu0 0
  %758 = vmatprep.subr.bf16.mxu0 0
  %759 = vmatpush1.bf16.msra.mxu0 0
  %760 = vmatprep.subr.bf16.mxu0 0
  %761 = vmatpush1.bf16.msra.mxu0 0
  %762 = vmatprep.subr.bf16.mxu0 0
  %763 = vmatpush1.bf16.msra.mxu0 0
  %764 = vmatprep.subr.bf16.mxu0 0
  %765 = vmatpush1.bf16.msra.mxu0 0
  %766 = vmatprep.subr.bf16.mxu0 0
  %767 = vmatpush1.bf16.msra.mxu0 0
  %768 = vmatprep.subr.bf16.mxu0 0
  %769 = vmatpush1.bf16.msra.mxu0 0
  %770 = vmatprep.subr.bf16.mxu0 0
  %771 = vmatpush1.bf16.msra.mxu0 0
  %772 = vmatprep.subr.bf16.mxu0 0
  %773 = vmatpush1.bf16.msra.mxu0 0
  %774 = vmatprep.subr.bf16.mxu0 0
  %775 = vmatpush1.bf16.msra.mxu0 0
  %776 = vmatprep.subr.bf16.mxu0 0
  %777 = vmatpush1.bf16.msra.mxu0 0
  %778 = vmatprep.mubr.bf16.mxu0 0
  %779 = vmatmul.mubr.bf16.gmra.mrb[0].mxu0 %v744
  %v780 = vpop.f32.mrb[0].mxu0
  %v781 = vadd.f32 0.0, %v780
  %v782 = vpop.f32.mrb[0].mxu0
  %v783 = vpop.f32.mrb[0].mxu0
  %v784 = vpop.f32.mrb[0].mxu0
  %785 = vdwg.mxu0
  %v786 = vadd.f32 %v368, %v781
  %v787 = vxor.u32 %v786, 2147483648
  %v788 = vmul.f32 %v787, 1.442695
  %v789 = vpow.pop %v788
  %v790 = vadd.f32 %v789, 1.0
  %v791 = vrcp.pop %v790
  %v792 = vmul.f32 1.0, %v791
  %v793 = vtanh.pop %v786
  %v794 = vmul.f32 %v792, %v732
  %796 = vrot.lane.b32.xlu0 %v793, 104
  %v797 = vpop.permute.xlu0 %796
  %v799 = vmul.f32 %v792, %v797
  %801 = vrot.lane.b32.xlu0 %v799, 8
  %v802 = vpop.permute.xlu0 %801
  %v804 = vadd.f32 %v794, %v802
  %v805 = vtanh.pop %v804
  %807 = vrot.lane.b32.xlu0 %v805, 8
  %v808 = vpop.permute.xlu0 %807
  %v810 = vmul.f32 %v792, %v808
  %v811 = vpack.c.bf16 %v810, %v810
  %813 = vrot.lane.b32.xlu0 %v811, 112
  %v814 = vpop.permute.xlu0 %813
  %v816 = vsel %vm298, %v814, 0
  %818 = vmatprep.subr.bf16.mxu0 0
  %819 = vmatpush1.bf16.msra.mxu0 %v384
  %820 = vmatprep.subr.bf16.mxu0 0
  %821 = vmatpush1.bf16.msra.mxu0 0
  %822 = vmatprep.subr.bf16.mxu0 0
  %823 = vmatpush1.bf16.msra.mxu0 0
  %824 = vmatprep.subr.bf16.mxu0 0
  %825 = vmatpush1.bf16.msra.mxu0 0
  %826 = vmatprep.subr.bf16.mxu0 0
  %827 = vmatpush1.bf16.msra.mxu0 0
  %828 = vmatprep.subr.bf16.mxu0 0
  %829 = vmatpush1.bf16.msra.mxu0 0
  %830 = vmatprep.subr.bf16.mxu0 0
  %831 = vmatpush1.bf16.msra.mxu0 0
  %832 = vmatprep.subr.bf16.mxu0 0
  %833 = vmatpush1.bf16.msra.mxu0 0
  %834 = vmatprep.subr.bf16.mxu0 0
  %835 = vmatpush1.bf16.msra.mxu0 0
  %836 = vmatprep.subr.bf16.mxu0 0
  %837 = vmatpush1.bf16.msra.mxu0 0
  %838 = vmatprep.subr.bf16.mxu0 0
  %839 = vmatpush1.bf16.msra.mxu0 0
  %840 = vmatprep.subr.bf16.mxu0 0
  %841 = vmatpush1.bf16.msra.mxu0 0
  %842 = vmatprep.subr.bf16.mxu0 0
  %843 = vmatpush1.bf16.msra.mxu0 0
  %844 = vmatprep.subr.bf16.mxu0 0
  %845 = vmatpush1.bf16.msra.mxu0 0
  %846 = vmatprep.subr.bf16.mxu0 0
  %847 = vmatpush1.bf16.msra.mxu0 0
  %848 = vmatprep.subr.bf16.mxu0 0
  %849 = vmatpush1.bf16.msra.mxu0 0
  %850 = vmatprep.mubr.bf16.mxu0 0
  %851 = vmatmul.mubr.bf16.gmra.mrb[0].mxu0 %v816
  %v852 = vpop.f32.mrb[0].mxu0
  %v853 = vadd.f32 0.0, %v852
  %v854 = vpop.f32.mrb[0].mxu0
  %v855 = vpop.f32.mrb[0].mxu0
  %v856 = vpop.f32.mrb[0].mxu0
  %857 = vdwg.mxu0
  %v858 = vadd.f32 %v373, %v853
  %v859 = vxor.u32 %v858, 2147483648
  %v860 = vmul.f32 %v859, 1.442695
  %v861 = vpow.pop %v860
  %v862 = vadd.f32 %v861, 1.0
  %v863 = vrcp.pop %v862
  %v864 = vmul.f32 1.0, %v863
  %v865 = vtanh.pop %v858
  %v866 = vmul.f32 %v864, %v804
  %868 = vrot.lane.b32.xlu0 %v865, 104
  %v869 = vpop.permute.xlu0 %868
  %v871 = vmul.f32 %v864, %v869
  %873 = vrot.lane.b32.xlu0 %v871, 8
  %v874 = vpop.permute.xlu0 %873
  %v876 = vadd.f32 %v866, %v874
  %v877 = vtanh.pop %v876
  %879 = vrot.lane.b32.xlu0 %v877, 8
  %v880 = vpop.permute.xlu0 %879
  %v882 = vmul.f32 %v864, %v880
  %v883 = vpack.c.bf16 %v882, %v882
  %885 = vrot.lane.b32.xlu0 %v883, 112
  %v886 = vpop.permute.xlu0 %885
  %v888 = vsel %vm298, %v886, 0
  %890 = vmatprep.subr.bf16.mxu0 0
  %891 = vmatpush1.bf16.msra.mxu0 %v384
  %892 = vmatprep.subr.bf16.mxu0 0
  %893 = vmatpush1.bf16.msra.mxu0 0
  %894 = vmatprep.subr.bf16.mxu0 0
  %895 = vmatpush1.bf16.msra.mxu0 0
  %896 = vmatprep.subr.bf16.mxu0 0
  %897 = vmatpush1.bf16.msra.mxu0 0
  %898 = vmatprep.subr.bf16.mxu0 0
  %899 = vmatpush1.bf16.msra.mxu0 0
  %900 = vmatprep.subr.bf16.mxu0 0
  %901 = vmatpush1.bf16.msra.mxu0 0
  %902 = vmatprep.subr.bf16.mxu0 0
  %903 = vmatpush1.bf16.msra.mxu0 0
  %904 = vmatprep.subr.bf16.mxu0 0
  %905 = vmatpush1.bf16.msra.mxu0 0
  %906 = vmatprep.subr.bf16.mxu0 0
  %907 = vmatpush1.bf16.msra.mxu0 0
  %908 = vmatprep.subr.bf16.mxu0 0
  %909 = vmatpush1.bf16.msra.mxu0 0
  %910 = vmatprep.subr.bf16.mxu0 0
  %911 = vmatpush1.bf16.msra.mxu0 0
  %912 = vmatprep.subr.bf16.mxu0 0
  %913 = vmatpush1.bf16.msra.mxu0 0
  %914 = vmatprep.subr.bf16.mxu0 0
  %915 = vmatpush1.bf16.msra.mxu0 0
  %916 = vmatprep.subr.bf16.mxu0 0
  %917 = vmatpush1.bf16.msra.mxu0 0
  %918 = vmatprep.subr.bf16.mxu0 0
  %919 = vmatpush1.bf16.msra.mxu0 0
  %920 = vmatprep.subr.bf16.mxu0 0
  %921 = vmatpush1.bf16.msra.mxu0 0
  %922 = vmatprep.mubr.bf16.mxu0 0
  %923 = vmatmul.mubr.bf16.gmra.mrb[0].mxu0 %v888
  %v924 = vpop.f32.mrb[0].mxu0
  %v925 = vadd.f32 0.0, %v924
  %v926 = vpop.f32.mrb[0].mxu0
  %v927 = vpop.f32.mrb[0].mxu0
  %v928 = vpop.f32.mrb[0].mxu0
  %929 = vdwg.mxu0
  %v930 = vadd.f32 %v376, %v925
  %v931 = vxor.u32 %v930, 2147483648
  %v932 = vmul.f32 %v931, 1.442695
  %v933 = vpow.pop %v932
  %v934 = vadd.f32 %v933, 1.0
  %v935 = vrcp.pop %v934
  %v936 = vmul.f32 1.0, %v935
  %v937 = vtanh.pop %v930
  %v938 = vmul.f32 %v936, %v876
  %940 = vrot.lane.b32.xlu0 %v937, 104
  %v941 = vpop.permute.xlu0 %940
  %v943 = vmul.f32 %v936, %v941
  %945 = vrot.lane.b32.xlu0 %v943, 8
  %v946 = vpop.permute.xlu0 %945
  %v948 = vadd.f32 %v938, %v946
  %v949 = vtanh.pop %v948
  %951 = vrot.lane.b32.xlu0 %v949, 8
  %v952 = vpop.permute.xlu0 %951
  %v954 = vmul.f32 %v936, %v952
  %v955 = vpack.c.bf16 %v954, %v954
  %v956 = vld [vmem:[%s8] sm:$0xf]
  %v957 = vld [vmem:[%s9] sm:$0x1]
  %v959 = vlaneseq
  %v960 = vshrl.u32 %v959, 7
  %v961 = vsub.s32 0, %v960
  %v962 = vrot.slane %v957, %v961
  %965 = vrot.lane.b32.xlu0 %v955, 112
  %v966 = vpop.permute.xlu0 %965
  %v968 = vsel %vm298, %v966, 0
  %v971 = vsel %vm217, %v956, 0
  %973 = vmatprep.subr.bf16.mxu0 0
  %974 = vmatpush1.bf16.msra.mxu0 %v971
  %975 = vmatprep.subr.bf16.mxu0 0
  %976 = vmatpush1.bf16.msra.mxu0 0
  %977 = vmatprep.subr.bf16.mxu0 0
  %978 = vmatpush1.bf16.msra.mxu0 0
  %979 = vmatprep.subr.bf16.mxu0 0
  %980 = vmatpush1.bf16.msra.mxu0 0
  %981 = vmatprep.subr.bf16.mxu0 0
  %982 = vmatpush1.bf16.msra.mxu0 0
  %983 = vmatprep.subr.bf16.mxu0 0
  %984 = vmatpush1.bf16.msra.mxu0 0
  %985 = vmatprep.subr.bf16.mxu0 0
  %986 = vmatpush1.bf16.msra.mxu0 0
  %987 = vmatprep.subr.bf16.mxu0 0
  %988 = vmatpush1.bf16.msra.mxu0 0
  %989 = vmatprep.subr.bf16.mxu0 0
  %990 = vmatpush1.bf16.msra.mxu0 0
  %991 = vmatprep.subr.bf16.mxu0 0
  %992 = vmatpush1.bf16.msra.mxu0 0
  %993 = vmatprep.subr.bf16.mxu0 0
  %994 = vmatpush1.bf16.msra.mxu0 0
  %995 = vmatprep.subr.bf16.mxu0 0
  %996 = vmatpush1.bf16.msra.mxu0 0
  %997 = vmatprep.subr.bf16.mxu0 0
  %998 = vmatpush1.bf16.msra.mxu0 0
  %999 = vmatprep.subr.bf16.mxu0 0
  %1000 = vmatpush1.bf16.msra.mxu0 0
  %1001 = vmatprep.subr.bf16.mxu0 0
  %1002 = vmatpush1.bf16.msra.mxu0 0
  %1003 = vmatprep.subr.bf16.mxu0 0
  %1004 = vmatpush1.bf16.msra.mxu0 0
  %1005 = vmatprep.mubr.bf16.mxu0 0
  %1006 = vmatmul.mubr.bf16.gmra.mrb[0].mxu0 %v968
  %v1007 = vpop.f32.mrb[0].mxu0
  %v1008 = vadd.f32 %v962, %v1007
  %v1009 = vpop.f32.mrb[0].mxu0
  %v1010 = vpop.f32.mrb[0].mxu0
  %v1011 = vpop.f32.mrb[0].mxu0
  %1012 = vdwg.mxu0
  %1013 = vst [vmem:[%s10] sm:$0xff] %v1008
  // Predicated region
  $region42: #{cnn_lstm_forward.1} parent=0 // pred_check
    _
  $region43: #{cnn_lstm_forward.1} parent=0 // pred_check_branch
    %1015 = sbr.rel (0) target = $region45
  $region44: #{cnn_lstm_forward.1} parent=0 // pred_region
    _
  $region45: #{cnn_lstm_forward.1} parent=0 // pred_fallthru
    _
  // Predicated region
  $region46: #{cnn_lstm_forward.1} parent=0 // pred_check
    _
  $region47: #{cnn_lstm_forward.1} parent=0 // pred_check_branch
    %1017 = sbr.rel (0) target = $region49
  $region48: #{cnn_lstm_forward.1} parent=0 // pred_region
    _
  $region49: #{cnn_lstm_forward.1} parent=0 // pred_fallthru
    _

</llo_original>
